<compile_context>
chip_gen: v7x
topology: tpu7x:2x2x1
jax: 0.10.0
libtpu: 0.0.40
codegen_flags: <defaults>
</compile_context>

<pallas_src>
import jax
import jax.numpy as jnp
from jax.experimental import pallas as pl
from jax.experimental.pallas import tpu as pltpu

EPS = 1e-5  # PyTorch nn.LayerNorm default


def _round_up(v, m):
    return (v + m - 1) // m * m


def _cdiv(a, b):
    return -(-a // b)


def _physical_vmem_bytes():
    """Best-effort physical VMEM size for the current TPU generation."""
    try:
        return int(pltpu.get_tpu_info().vmem_capacity_bytes)
    except Exception:
        pass
    try:
        kind = jax.devices()[0].device_kind.lower()
        if "v7" in kind:
            return 64 * 1024 * 1024
    except Exception:
        pass
    return 128 * 1024 * 1024  # v5e / v6e


def prenorm_linear_kernel(x_ref, gamma_ref, beta_ref, w_ref, b_ref, o_ref, y_ref):
    """One (row-tile, out-col-tile) grid step of fn(LayerNorm(x)), fn = Linear."""
    # LayerNorm once per row tile (inner axis j == 0); stash normalized rows
    # in VMEM scratch and reuse them for every weight column block.
    @pl.when(pl.program_id(1) == 0)
    def _():
        x = x_ref[...].astype(jnp.float32)
        inv_d = jnp.float32(1.0 / x.shape[-1])
        mean = jnp.sum(x, axis=-1, keepdims=True) * inv_d
        xc = x - mean
        var = jnp.sum(xc * xc, axis=-1, keepdims=True) * inv_d  # biased, PyTorch semantics
        y = xc * jax.lax.rsqrt(var + EPS)
        y = y * gamma_ref[...].astype(jnp.float32) + beta_ref[...].astype(jnp.float32)
        y_ref[...] = y.astype(y_ref.dtype)

    # fn = Linear: (TM, D) @ (D, TN) on the MXU, f32 accumulation.
    acc = jnp.dot(y_ref[...], w_ref[...], preferred_element_type=jnp.float32)
    acc = acc + b_ref[...].astype(jnp.float32)
    o_ref[...] = acc.astype(o_ref.dtype)


def prenorm(x, gamma, beta, w, b, *, matmul_dtype=None):
    """x: [..., D] -> fn(LayerNorm(x)) with fn = Linear(D, D)."""
    *lead, D = x.shape
    R = 1
    for s in lead:
        R *= s
    assert w.shape == (D, D)

    x2 = x.reshape(R, D)
    out_dtype = x.dtype

    # MXU operand dtype.  Default keeps the weight's native dtype (exact f32
    # path).  Pass jnp.bfloat16 to get MXU-peak matmul + half the weight DMA
    # traffic at ~1e-3 accuracy.
    mm_dtype = jnp.dtype(matmul_dtype) if matmul_dtype is not None else jnp.dtype(w.dtype)
    w2 = w.astype(mm_dtype)
    gamma2 = gamma.reshape(1, D)
    beta2 = beta.reshape(1, D)
    b2 = b.reshape(1, D)

    elt_x = jnp.dtype(x.dtype).itemsize
    elt_w = mm_dtype.itemsize
    elt_p = jnp.dtype(gamma2.dtype).itemsize
    elt_b = jnp.dtype(b2.dtype).itemsize
    sub = 8 if elt_x >= 4 else (16 if elt_x == 2 else 32)

    # ---- generation-aware VMEM budget ----
    physical = _physical_vmem_bytes()
    vmem_limit = min(physical * 3 // 4, 100 * 1024 * 1024)  # leave compiler headroom
    budget = vmem_limit - (4 << 20)

    # ---- output-feature (N) tiling: stream W when it would hog VMEM ----
    w_block_target = 8 * 1024 * 1024
    if D % 128 == 0 and D * D * elt_w > w_block_target:
        TN = max(128, (w_block_target // (D * elt_w)) // 128 * 128)
        TN = min(TN, D)
    else:
        # Resident weight; full-extent blocks are legal for any D.
        # TODO(synk): D not a multiple of 128 cannot be column-tiled, so very
        # large non-128-multiple D keeps W fully resident.
        TN = D
    NB = _cdiv(D, TN)

    def run(single_consts):
        # VMEM accounting: resident operands + scratch + f32 intermediates are
        # all counted before solving for the row tile TM.
        c1 = 1 if single_consts else 2
        w_bufs = (1 if single_consts else 2) if NB == 1 else 2
        b_bufs = (1 if single_consts else 2) if NB == 1 else 2
        fixed = (w_bufs * D * TN * elt_w            # weight block(s)
                 + c1 * 2 * D * elt_p               # gamma, beta
                 + b_bufs * TN * elt_b)             # bias
        per_row = (2 * D * elt_x                    # x, double-buffered
                   + 2 * TN * elt_x                 # out, double-buffered
                   + D * elt_w                      # normalized-row scratch
                   + 4 * D * 4)                     # in-kernel f32 intermediates
        TM = (budget - fixed) // max(per_row, 1)
        TM = max(sub, min(TM // sub * sub, 1024, _round_up(R, sub)))
        # Keep >= ~4 row steps so the "parallel" row axis can shard across cores.
        if R > 4 * sub:
            TM = max(sub, min(TM, _round_up(_cdiv(R, 4), sub)))
        NR = _cdiv(R, TM)  # ragged last block is masked by Pallas; no pad copy

        def const_spec(shape):
            if single_consts:
                return pl.BlockSpec(shape, lambda i, j: (0, 0),
                                    pipeline_mode=pl.Buffered(1))
            return pl.BlockSpec(shape, lambda i, j: (0, 0))

        if NB == 1:
            w_spec = const_spec((D, TN))
            b_spec = const_spec((1, TN))
        else:
            w_spec = pl.BlockSpec((D, TN), lambda i, j: (0, j))
            b_spec = pl.BlockSpec((1, TN), lambda i, j: (0, j))

        cost = pl.CostEstimate(
            flops=2 * R * D * D + 10 * R * D,
            transcendentals=R,
            bytes_accessed=2 * R * D * elt_x + NR * D * D * elt_w + 3 * D * elt_p,
        )

        return pl.pallas_call(
            prenorm_linear_kernel,
            out_shape=jax.ShapeDtypeStruct((R, D), out_dtype),
            grid_spec=pltpu.PrefetchScalarGridSpec(
                num_scalar_prefetch=0,
                grid=(NR, NB),
                in_specs=[
                    pl.BlockSpec((TM, D), lambda i, j: (i, 0)),  # x: not re-DMA'd over j
                    const_spec((1, D)),                           # gamma
                    const_spec((1, D)),                           # beta
                    w_spec,                                       # W (resident or streamed)
                    b_spec,                                       # bias
                ],
                out_specs=pl.BlockSpec((TM, TN), lambda i, j: (i, j)),
                scratch_shapes=[pltpu.VMEM((TM, D), mm_dtype)],   # normalized rows
            ),
            compiler_params=pltpu.CompilerParams(
                dimension_semantics=("parallel", "arbitrary"),
                vmem_limit_bytes=int(vmem_limit),
            ),
            cost_estimate=cost,
        )(x2, gamma2, beta2, w2, b2)

    try:
        out = run(True)
    except Exception:
        # Fallback if this jax build rejects single-buffered pipeline_mode.
        out = run(False)

    return out.reshape(*lead, D)


def prenorm_ref(x, gamma, beta, w, b):
    xf = x.astype(jnp.float32)
    mean = jnp.mean(xf, axis=-1, keepdims=True)
    var = jnp.mean((xf - mean) ** 2, axis=-1, keepdims=True)
    y = (xf - mean) / jnp.sqrt(var + EPS) * gamma + beta
    return (y @ w + b).astype(x.dtype)


if __name__ == "__main__":
    key = jax.random.PRNGKey(0)
    B, N, D = 2, 8, 32
    kx, kw, kb = jax.random.split(key, 3)

    x = jax.random.normal(kx, (B, N, D), dtype=jnp.float32)

    # LayerNorm params (PyTorch init: ones / zeros)
    gamma = jnp.ones((D,), dtype=jnp.float32)
    beta = jnp.zeros((D,), dtype=jnp.float32)

    # Deterministic params for the chosen fn = Linear(D, D)
    w = jax.random.normal(kw, (D, D), dtype=jnp.float32) * 0.02
    b = jax.random.normal(kb, (D,), dtype=jnp.float32) * 0.02

    out = prenorm(x, gamma, beta, w, b)
    jax.block_until_ready(out)

    ref = prenorm_ref(x, gamma, beta, w, b)
    assert out.shape == (B, N, D)
    err = float(jnp.max(jnp.abs(out - ref)))
    assert jnp.allclose(out, ref, atol=1e-5, rtol=1e-5), err

    print("KERNEL_OK")
</pallas_src>

<mosaic_0001>
module attributes {stable_mosaic.version = 11 : i64} {
  func.func @prenorm_linear_kernel(%arg0: i32, %arg1: i32, %arg2: memref<16x32xf32, #tpu.memory_space<vmem>>, %arg3: memref<1x32xf32, #tpu.memory_space<vmem>>, %arg4: memref<1x32xf32, #tpu.memory_space<vmem>>, %arg5: memref<32x32xf32, #tpu.memory_space<vmem>>, %arg6: memref<1x32xf32, #tpu.memory_space<vmem>>, %arg7: memref<16x32xf32, #tpu.memory_space<vmem>>, %arg8: memref<16x32xf32, #tpu.memory_space<vmem>>) attributes {dimension_semantics = [#tpu.dimension_semantics<parallel>, #tpu.dimension_semantics<arbitrary>], iteration_bounds = array<i64: 1, 1>, scalar_prefetch = 0 : i64, scratch_operands = 1 : i64, tpu.core_type = #tpu.core_type<tc>, window_params = [{transform_indices = @transform_0, window_bounds = array<i64: 16, 32>}, {pipeline_mode = #tpu.pipeline_mode<synchronous>, transform_indices = @transform_1, window_bounds = array<i64: 1, 32>}, {pipeline_mode = #tpu.pipeline_mode<synchronous>, transform_indices = @transform_2, window_bounds = array<i64: 1, 32>}, {pipeline_mode = #tpu.pipeline_mode<synchronous>, transform_indices = @transform_3, window_bounds = array<i64: 32, 32>}, {pipeline_mode = #tpu.pipeline_mode<synchronous>, transform_indices = @transform_4, window_bounds = array<i64: 1, 32>}, {transform_indices = @transform_5, window_bounds = array<i64: 16, 32>}]} {
    %c0_i32 = arith.constant 0 : i32
    %0 = arith.cmpi eq, %arg1, %c0_i32 : i32
    %1 = arith.extui %0 : i1 to i32
    %c0_i32_0 = arith.constant 0 : i32
    %2 = arith.cmpi ne, %1, %c0_i32_0 : i32
    scf.if %2 {
      %c0_8 = arith.constant 0 : index
      %c0_9 = arith.constant 0 : index
      %10 = vector.load %arg2[%c0_8, %c0_9] : memref<16x32xf32, #tpu.memory_space<vmem>>, vector<16x32xf32>
      %cst_10 = arith.constant dense<0.000000e+00> : vector<16xf32>
      %11 = vector.multi_reduction <add>, %10, %cst_10 [1] : vector<16x32xf32> to vector<16xf32>
      %12 = vector.shape_cast %11 : vector<16xf32> to vector<16x1xf32>
      %cst_11 = arith.constant 3.125000e-02 : f32
      %13 = vector.broadcast %cst_11 : f32 to vector<16x1xf32>
      %14 = arith.mulf %12, %13 : vector<16x1xf32>
      %15 = vector.broadcast %14 : vector<16x1xf32> to vector<16x32xf32>
      %16 = arith.subf %10, %15 : vector<16x32xf32>
      %17 = arith.mulf %16, %16 : vector<16x32xf32>
      %cst_12 = arith.constant dense<0.000000e+00> : vector<16xf32>
      %18 = vector.multi_reduction <add>, %17, %cst_12 [1] : vector<16x32xf32> to vector<16xf32>
      %19 = vector.shape_cast %18 : vector<16xf32> to vector<16x1xf32>
      %cst_13 = arith.constant 3.125000e-02 : f32
      %20 = vector.broadcast %cst_13 : f32 to vector<16x1xf32>
      %21 = arith.mulf %19, %20 : vector<16x1xf32>
      %cst_14 = arith.constant 9.99999974E-6 : f32
      %22 = vector.broadcast %cst_14 : f32 to vector<16x1xf32>
      %23 = arith.addf %21, %22 : vector<16x1xf32>
      %24 = math.rsqrt %23 : vector<16x1xf32>
      %25 = vector.broadcast %24 : vector<16x1xf32> to vector<16x32xf32>
      %26 = arith.mulf %16, %25 : vector<16x32xf32>
      %c0_15 = arith.constant 0 : index
      %c0_16 = arith.constant 0 : index
      %27 = vector.load %arg3[%c0_15, %c0_16] : memref<1x32xf32, #tpu.memory_space<vmem>>, vector<1x32xf32>
      %28 = vector.broadcast %27 : vector<1x32xf32> to vector<16x32xf32>
      %29 = arith.mulf %26, %28 : vector<16x32xf32>
      %c0_17 = arith.constant 0 : index
      %c0_18 = arith.constant 0 : index
      %30 = vector.load %arg4[%c0_17, %c0_18] : memref<1x32xf32, #tpu.memory_space<vmem>>, vector<1x32xf32>
      %31 = vector.broadcast %30 : vector<1x32xf32> to vector<16x32xf32>
      %32 = arith.addf %29, %31 : vector<16x32xf32>
      %c0_19 = arith.constant 0 : index
      %c0_20 = arith.constant 0 : index
      %33 = vector.load %arg8[%c0_19, %c0_20] : memref<16x32xf32, #tpu.memory_space<vmem>>, vector<16x32xf32>
      tpu.vector_store %arg8[%c0_19, %c0_20], %32 {strides = array<i32>} : memref<16x32xf32, #tpu.memory_space<vmem>>, vector<16x32xf32>,
    } else {
    }
    %c0 = arith.constant 0 : index
    %c0_1 = arith.constant 0 : index
    %3 = vector.load %arg8[%c0, %c0_1] : memref<16x32xf32, #tpu.memory_space<vmem>>, vector<16x32xf32>
    %c0_2 = arith.constant 0 : index
    %c0_3 = arith.constant 0 : index
    %4 = vector.load %arg5[%c0_2, %c0_3] : memref<32x32xf32, #tpu.memory_space<vmem>>, vector<32x32xf32>
    %cst = arith.constant dense<0.000000e+00> : vector<16x32xf32>
    %5 = tpu.matmul %3, %4, %cst {dimension_numbers = #tpu.dot_dimension_numbers<[1], [0], [0], [1], [0, 0, 1, 1], [], []>} : vector<16x32xf32>, vector<32x32xf32>, vector<16x32xf32> -> vector<16x32xf32>
    %c0_4 = arith.constant 0 : index
    %c0_5 = arith.constant 0 : index
    %6 = vector.load %arg6[%c0_4, %c0_5] : memref<1x32xf32, #tpu.memory_space<vmem>>, vector<1x32xf32>
    %7 = vector.broadcast %6 : vector<1x32xf32> to vector<16x32xf32>
    %8 = arith.addf %5, %7 : vector<16x32xf32>
    %c0_6 = arith.constant 0 : index
    %c0_7 = arith.constant 0 : index
    %9 = vector.load %arg7[%c0_6, %c0_7] : memref<16x32xf32, #tpu.memory_space<vmem>>, vector<16x32xf32>
    tpu.vector_store %arg7[%c0_6, %c0_7], %8 {strides = array<i32>} : memref<16x32xf32, #tpu.memory_space<vmem>>, vector<16x32xf32>,
    return
  }
  func.func @transform_0(%arg0: i32, %arg1: i32) -> (i32, i32) {
    %c0_i32 = arith.constant 0 : i32
    %c0_i32_0 = arith.constant 0 : i32
    return %arg0, %c0_i32 : i32, i32
  }
  func.func @transform_1(%arg0: i32, %arg1: i32) -> (i32, i32) {
    %c0_i32 = arith.constant 0 : i32
    %c0_i32_0 = arith.constant 0 : i32
    %c0_i32_1 = arith.constant 0 : i32
    return %c0_i32, %c0_i32_0 : i32, i32
  }
  func.func @transform_2(%arg0: i32, %arg1: i32) -> (i32, i32) {
    %c0_i32 = arith.constant 0 : i32
    %c0_i32_0 = arith.constant 0 : i32
    %c0_i32_1 = arith.constant 0 : i32
    return %c0_i32, %c0_i32_0 : i32, i32
  }
  func.func @transform_3(%arg0: i32, %arg1: i32) -> (i32, i32) {
    %c0_i32 = arith.constant 0 : i32
    %c0_i32_0 = arith.constant 0 : i32
    %c0_i32_1 = arith.constant 0 : i32
    return %c0_i32, %c0_i32_0 : i32, i32
  }
  func.func @transform_4(%arg0: i32, %arg1: i32) -> (i32, i32) {
    %c0_i32 = arith.constant 0 : i32
    %c0_i32_0 = arith.constant 0 : i32
    %c0_i32_1 = arith.constant 0 : i32
    return %c0_i32, %c0_i32_0 : i32, i32
  }
  func.func @transform_5(%arg0: i32, %arg1: i32) -> (i32, i32) {
    %c0_i32 = arith.constant 0 : i32
    return %arg0, %arg1 : i32, i32
  }
}

module attributes {stable_mosaic.version = 11 : i64} {
  func.func @prenorm_linear_kernel(%arg0: i32, %arg1: i32, %arg2: memref<16x32xf32, #tpu.memory_space<vmem>>, %arg3: memref<1x32xf32, #tpu.memory_space<vmem>>, %arg4: memref<1x32xf32, #tpu.memory_space<vmem>>, %arg5: memref<32x32xf32, #tpu.memory_space<vmem>>, %arg6: memref<1x32xf32, #tpu.memory_space<vmem>>, %arg7: memref<16x32xf32, #tpu.memory_space<vmem>>, %arg8: memref<16x32xf32, #tpu.memory_space<vmem>>) attributes {dimension_semantics = [#tpu.dimension_semantics<parallel>, #tpu.dimension_semantics<arbitrary>], iteration_bounds = array<i64: 1, 1>, scalar_prefetch = 0 : i64, scratch_operands = 1 : i64, tpu.core_type = #tpu.core_type<tc>, window_params = [{transform_indices = @transform_0, window_bounds = array<i64: 16, 32>}, {pipeline_mode = #tpu.pipeline_mode<synchronous>, transform_indices = @transform_1, window_bounds = array<i64: 1, 32>}, {pipeline_mode = #tpu.pipeline_mode<synchronous>, transform_indices = @transform_2, window_bounds = array<i64: 1, 32>}, {pipeline_mode = #tpu.pipeline_mode<synchronous>, transform_indices = @transform_3, window_bounds = array<i64: 32, 32>}, {pipeline_mode = #tpu.pipeline_mode<synchronous>, transform_indices = @transform_4, window_bounds = array<i64: 1, 32>}, {transform_indices = @transform_5, window_bounds = array<i64: 16, 32>}]} {
    %c0_i32 = arith.constant 0 : i32
    %0 = arith.cmpi eq, %arg1, %c0_i32 : i32
    %1 = arith.extui %0 : i1 to i32
    %c0_i32_0 = arith.constant 0 : i32
    %2 = arith.cmpi ne, %1, %c0_i32_0 : i32
    scf.if %2 {
      %c0_8 = arith.constant 0 : index
      %c0_9 = arith.constant 0 : index
      %10 = vector.load %arg2[%c0_8, %c0_9] : memref<16x32xf32, #tpu.memory_space<vmem>>, vector<16x32xf32>
      %cst_10 = arith.constant dense<0.000000e+00> : vector<16xf32>
      %11 = vector.multi_reduction <add>, %10, %cst_10 [1] : vector<16x32xf32> to vector<16xf32>
      %12 = vector.shape_cast %11 : vector<16xf32> to vector<16x1xf32>
      %cst_11 = arith.constant 3.125000e-02 : f32
      %13 = vector.broadcast %cst_11 : f32 to vector<16x1xf32>
      %14 = arith.mulf %12, %13 : vector<16x1xf32>
      %15 = vector.broadcast %14 : vector<16x1xf32> to vector<16x32xf32>
      %16 = arith.subf %10, %15 : vector<16x32xf32>
      %17 = arith.mulf %16, %16 : vector<16x32xf32>
      %cst_12 = arith.constant dense<0.000000e+00> : vector<16xf32>
      %18 = vector.multi_reduction <add>, %17, %cst_12 [1] : vector<16x32xf32> to vector<16xf32>
      %19 = vector.shape_cast %18 : vector<16xf32> to vector<16x1xf32>
      %cst_13 = arith.constant 3.125000e-02 : f32
      %20 = vector.broadcast %cst_13 : f32 to vector<16x1xf32>
      %21 = arith.mulf %19, %20 : vector<16x1xf32>
      %cst_14 = arith.constant 9.99999974E-6 : f32
      %22 = vector.broadcast %cst_14 : f32 to vector<16x1xf32>
      %23 = arith.addf %21, %22 : vector<16x1xf32>
      %24 = math.rsqrt %23 : vector<16x1xf32>
      %25 = vector.broadcast %24 : vector<16x1xf32> to vector<16x32xf32>
      %26 = arith.mulf %16, %25 : vector<16x32xf32>
      %c0_15 = arith.constant 0 : index
      %c0_16 = arith.constant 0 : index
      %27 = vector.load %arg3[%c0_15, %c0_16] : memref<1x32xf32, #tpu.memory_space<vmem>>, vector<1x32xf32>
      %28 = vector.broadcast %27 : vector<1x32xf32> to vector<16x32xf32>
      %29 = arith.mulf %26, %28 : vector<16x32xf32>
      %c0_17 = arith.constant 0 : index
      %c0_18 = arith.constant 0 : index
      %30 = vector.load %arg4[%c0_17, %c0_18] : memref<1x32xf32, #tpu.memory_space<vmem>>, vector<1x32xf32>
      %31 = vector.broadcast %30 : vector<1x32xf32> to vector<16x32xf32>
      %32 = arith.addf %29, %31 : vector<16x32xf32>
      %c0_19 = arith.constant 0 : index
      %c0_20 = arith.constant 0 : index
      %33 = vector.load %arg8[%c0_19, %c0_20] : memref<16x32xf32, #tpu.memory_space<vmem>>, vector<16x32xf32>
      tpu.vector_store %arg8[%c0_19, %c0_20], %32 {strides = array<i32>} : memref<16x32xf32, #tpu.memory_space<vmem>>, vector<16x32xf32>,
    } else {
    }
    %c0 = arith.constant 0 : index
    %c0_1 = arith.constant 0 : index
    %3 = vector.load %arg8[%c0, %c0_1] : memref<16x32xf32, #tpu.memory_space<vmem>>, vector<16x32xf32>
    %c0_2 = arith.constant 0 : index
    %c0_3 = arith.constant 0 : index
    %4 = vector.load %arg5[%c0_2, %c0_3] : memref<32x32xf32, #tpu.memory_space<vmem>>, vector<32x32xf32>
    %cst = arith.constant dense<0.000000e+00> : vector<16x32xf32>
    %5 = tpu.matmul %3, %4, %cst {dimension_numbers = #tpu.dot_dimension_numbers<[1], [0], [0], [1], [0, 0, 1, 1], [], []>} : vector<16x32xf32>, vector<32x32xf32>, vector<16x32xf32> -> vector<16x32xf32>
    %c0_4 = arith.constant 0 : index
    %c0_5 = arith.constant 0 : index
    %6 = vector.load %arg6[%c0_4, %c0_5] : memref<1x32xf32, #tpu.memory_space<vmem>>, vector<1x32xf32>
    %7 = vector.broadcast %6 : vector<1x32xf32> to vector<16x32xf32>
    %8 = arith.addf %5, %7 : vector<16x32xf32>
    %c0_6 = arith.constant 0 : index
    %c0_7 = arith.constant 0 : index
    %9 = vector.load %arg7[%c0_6, %c0_7] : memref<16x32xf32, #tpu.memory_space<vmem>>, vector<16x32xf32>
    tpu.vector_store %arg7[%c0_6, %c0_7], %8 {strides = array<i32>} : memref<16x32xf32, #tpu.memory_space<vmem>>, vector<16x32xf32>,
    return
  }
  func.func @transform_0(%arg0: i32, %arg1: i32) -> (i32, i32) {
    %c0_i32 = arith.constant 0 : i32
    %c0_i32_0 = arith.constant 0 : i32
    return %arg0, %c0_i32 : i32, i32
  }
  func.func @transform_1(%arg0: i32, %arg1: i32) -> (i32, i32) {
    %c0_i32 = arith.constant 0 : i32
    %c0_i32_0 = arith.constant 0 : i32
    %c0_i32_1 = arith.constant 0 : i32
    return %c0_i32, %c0_i32_0 : i32, i32
  }
  func.func @transform_2(%arg0: i32, %arg1: i32) -> (i32, i32) {
    %c0_i32 = arith.constant 0 : i32
    %c0_i32_0 = arith.constant 0 : i32
    %c0_i32_1 = arith.constant 0 : i32
    return %c0_i32, %c0_i32_0 : i32, i32
  }
  func.func @transform_3(%arg0: i32, %arg1: i32) -> (i32, i32) {
    %c0_i32 = arith.constant 0 : i32
    %c0_i32_0 = arith.constant 0 : i32
    %c0_i32_1 = arith.constant 0 : i32
    return %c0_i32, %c0_i32_0 : i32, i32
  }
  func.func @transform_4(%arg0: i32, %arg1: i32) -> (i32, i32) {
    %c0_i32 = arith.constant 0 : i32
    %c0_i32_0 = arith.constant 0 : i32
    %c0_i32_1 = arith.constant 0 : i32
    return %c0_i32, %c0_i32_0 : i32, i32
  }
  func.func @transform_5(%arg0: i32, %arg1: i32) -> (i32, i32) {
    %c0_i32 = arith.constant 0 : i32
    return %arg0, %arg1 : i32, i32
  }
}

</mosaic_0001>

<llo_original>
// kernel: tpu_custom_call.1
$region0: #{tpu_custom_call.1}
  #allocation0 [shape = 'u32[]', space=smem, size = 0x4, offset = 0x4, fixed_abs, tag = 'smem constant byte address 0x4 - core index']
  #allocation1 [shape = 'u32[144,128]{1,0:T(1,128)}', space=vmem, size = 0x12000, scoped, tag = 'internal scratch']
  #allocation2 [shape = 'f32[16,32]{1,0:T(8,128)}', space=vmem, size = 0x2000, scoped, tag = 'scratch operand']
  %s0 = inlined_call_operand.hbm [shape: f32[16,32], index: 0, kind: input, shape index: {}]
  %s1 = inlined_call_operand.hbm [shape: f32[1,32], index: 1, kind: input, shape index: {}]
  %s2 = inlined_call_operand.hbm [shape: f32[1,32], index: 2, kind: input, shape index: {}]
  %s3 = inlined_call_operand.hbm [shape: f32[32,32], index: 3, kind: input, shape index: {}]
  %s4 = inlined_call_operand.hbm [shape: f32[1,32], index: 4, kind: input, shape index: {}]
  %s5 = inlined_call_operand.hbm [shape: f32[16,32], index: 5, kind: output, shape index: {}]
  %s6 = sld [smem:[#allocation0]]
  $region54: #{tpu_custom_call.1} parent=0
    _
  %s8 = ssub.s32 1, %s6
  %s9 = scalar_select 0, %s8, %s6
  $region1: #{tpu_custom_call.1} parent=0
    #allocation3 [shape = 'u8[8192]{0}', space=vmem, size = 0x2000, scoped, tag = 'input window, operand 0, single buffered']
    #allocation4 [shape = 's32[1]{0}', space=sflag, size = 0x4, scoped, tag = 'scoped memory for tpu_custom_call.1']
    #allocation5 [shape = 's32[1]{0}', space=sflag, size = 0x4, scoped, tag = 'scoped memory for tpu_custom_call.1']
    #allocation6 [shape = 'u8[512]{0}', space=vmem, size = 0x400, scoped, tag = 'input window, operand 1, single buffered']
    #allocation7 [shape = 's32[1]{0}', space=sflag, size = 0x4, scoped, tag = 'scoped memory for tpu_custom_call.1']
    #allocation8 [shape = 'u8[512]{0}', space=vmem, size = 0x400, scoped, tag = 'input window, operand 2, single buffered']
    #allocation9 [shape = 'u8[16384]{0}', space=vmem, size = 0x4000, scoped, tag = 'input window, operand 3, single buffered']
    #allocation10 [shape = 's32[1]{0}', space=sflag, size = 0x4, scoped, tag = 'scoped memory for tpu_custom_call.1']
    #allocation11 [shape = 'u8[512]{0}', space=vmem, size = 0x400, scoped, tag = 'input window, operand 4, single buffered']
    #allocation12 [shape = 'u8[8192]{0}', space=vmem, size = 0x2000, scoped, tag = 'output window, operand 0, single buffered']
    %10 = vsyncpa [#allocation4], 0
    %11 = vsyncpa [#allocation7], 0
    %12 = vsyncpa [#allocation10], 0
    %13 = vsyncpa [#allocation5], 0
    // Predicated region
    $region2: #{tpu_custom_call.1} parent=1 // pred_check
      _
    $region3: #{tpu_custom_call.1} parent=1 // pred_check_branch
      %15 = sbr.rel (0) target = $region5
    $region4: #{tpu_custom_call.1} parent=1 // pred_region
      %s17 = ssub.s32 256, 256
      %18 = vsyncadd [#allocation4], %s17
      %s19 = sshll.u32 [#allocation3], 4
      %s20 = int_to_ptr.vmem [resolvable:$true] %s19
      %25 = dma.hbm_to_vmem [thread:$0]  %s0, 256, %s20, [#allocation4], 128, 128, 8
    $region5: #{tpu_custom_call.1} parent=1 // pred_fallthru
      _
    // Predicated region
    $region6: #{tpu_custom_call.1} parent=1 // pred_check
      _
    $region7: #{tpu_custom_call.1} parent=1 // pred_check_branch
      %27 = sbr.rel (0) target = $region9
    $region8: #{tpu_custom_call.1} parent=1 // pred_region
      %s29 = ssub.s32 16, 16
      %30 = vsyncadd [#allocation7], %s29
      %s32 = sshll.u32 [#allocation6], 4
      %s33 = int_to_ptr.vmem [resolvable:$true] %s32
      %35 = dma.hbm_to_vmem [thread:$0]  %s1, 16, %s33, [#allocation7]
    $region9: #{tpu_custom_call.1} parent=1 // pred_fallthru
      _
    // Predicated region
    $region10: #{tpu_custom_call.1} parent=1 // pred_check
      _
    $region11: #{tpu_custom_call.1} parent=1 // pred_check_branch
      %37 = sbr.rel (0) target = $region13
    $region12: #{tpu_custom_call.1} parent=1 // pred_region
      %s39 = ssub.s32 16, 16
      %40 = vsyncadd [#allocation7], %s39
      %s42 = sshll.u32 [#allocation8], 4
      %s43 = int_to_ptr.vmem [resolvable:$true] %s42
      %45 = dma.hbm_to_vmem [thread:$0]  %s2, 16, %s43, [#allocation7]
    $region13: #{tpu_custom_call.1} parent=1 // pred_fallthru
      _
    // Predicated region
    $region14: #{tpu_custom_call.1} parent=1 // pred_check
      _
    $region15: #{tpu_custom_call.1} parent=1 // pred_check_branch
      %47 = sbr.rel (0) target = $region17
    $region16: #{tpu_custom_call.1} parent=1 // pred_region
      %s49 = ssub.s32 512, 512
      %50 = vsyncadd [#allocation10], %s49
      %s51 = sshll.u32 [#allocation9], 4
      %s52 = int_to_ptr.vmem [resolvable:$true] %s51
      %57 = dma.hbm_to_vmem [thread:$0]  %s3, 512, %s52, [#allocation10], 128, 128, 8
    $region17: #{tpu_custom_call.1} parent=1 // pred_fallthru
      _
    // Predicated region
    $region18: #{tpu_custom_call.1} parent=1 // pred_check
      _
    $region19: #{tpu_custom_call.1} parent=1 // pred_check_branch
      %59 = sbr.rel (0) target = $region21
    $region20: #{tpu_custom_call.1} parent=1 // pred_region
      %s61 = ssub.s32 16, 16
      %62 = vsyncadd [#allocation10], %s61
      %s64 = sshll.u32 [#allocation11], 4
      %s65 = int_to_ptr.vmem [resolvable:$true] %s64
      %67 = dma.hbm_to_vmem [thread:$0]  %s4, 16, %s65, [#allocation10]
    $region21: #{tpu_custom_call.1} parent=1 // pred_fallthru
      _
    // Predicated region
    $region22: #{tpu_custom_call.1} parent=1 // pred_check
      _
    $region23: #{tpu_custom_call.1} parent=1 // pred_check_branch
      %69 = sbr.rel (0) target = $region25
    $region24: #{tpu_custom_call.1} parent=1 // pred_region
      %70 = dma.done [#allocation4], 256
    $region25: #{tpu_custom_call.1} parent=1 // pred_fallthru
      _
    // Predicated region
    $region26: #{tpu_custom_call.1} parent=1 // pred_check
      _
    $region27: #{tpu_custom_call.1} parent=1 // pred_check_branch
      %72 = sbr.rel (0) target = $region29
    $region28: #{tpu_custom_call.1} parent=1 // pred_region
      %73 = dma.done [#allocation7], 16
    $region29: #{tpu_custom_call.1} parent=1 // pred_fallthru
      _
    // Predicated region
    $region30: #{tpu_custom_call.1} parent=1 // pred_check
      _
    $region31: #{tpu_custom_call.1} parent=1 // pred_check_branch
      %75 = sbr.rel (0) target = $region33
    $region32: #{tpu_custom_call.1} parent=1 // pred_region
      %76 = dma.done [#allocation7], 16
    $region33: #{tpu_custom_call.1} parent=1 // pred_fallthru
      _
    // Predicated region
    $region34: #{tpu_custom_call.1} parent=1 // pred_check
      _
    $region35: #{tpu_custom_call.1} parent=1 // pred_check_branch
      %78 = sbr.rel (0) target = $region37
    $region36: #{tpu_custom_call.1} parent=1 // pred_region
      %79 = dma.done [#allocation10], 512
    $region37: #{tpu_custom_call.1} parent=1 // pred_fallthru
      _
    // Predicated region
    $region38: #{tpu_custom_call.1} parent=1 // pred_check
      _
    $region39: #{tpu_custom_call.1} parent=1 // pred_check_branch
      %81 = sbr.rel (0) target = $region41
    $region40: #{tpu_custom_call.1} parent=1 // pred_region
      %82 = dma.done [#allocation10], 16
    $region41: #{tpu_custom_call.1} parent=1 // pred_fallthru
      _
    %p83 = scmp.eq.s32.totalorder 0, 0
    // Predicated region
    $region42: #{tpu_custom_call.1} parent=1 // pred_check
      %p84 = pneg %p83
    $region43: #{tpu_custom_call.1} parent=1 // pred_check_branch
      %86 = sbr.rel (%p84) target = $region45
    $region44: #{tpu_custom_call.1} parent=1 // pred_region
      %v87 = vld [vmem:[#allocation3] sm:$0xff]
      %v88 = vld [vmem:[#allocation3 + $0x8] sm:$0xff]
      %vm89 = vcmask 261120
      %v90 = vsel %vm89, %v87, 0.0
      %91 = vadd.xlane.f32.xlu0 %v90
      %v92 = vpop.xlane.xlu0 %91
      %v93 = vsel %vm89, %v88, 0.0
      %94 = vadd.xlane.f32.xlu0 %v93
      %v95 = vpop.xlane.xlu0 %94
      %v96 = vmul.f32 %v92, 0.03125
      %v97 = vmul.f32 %v95, 0.03125
      %v98 = vsub.f32 %v87, %v96
      %v99 = vsub.f32 %v88, %v97
      %v100 = vmul.f32 %v98, %v98
      %v101 = vmul.f32 %v99, %v99
      %v102 = vsel %vm89, %v100, 0.0
      %103 = vadd.xlane.f32.xlu0 %v102
      %v104 = vpop.xlane.xlu0 %103
      %v105 = vsel %vm89, %v101, 0.0
      %106 = vadd.xlane.f32.xlu0 %v105
      %v107 = vpop.xlane.xlu0 %106
      %v108 = vmul.f32 %v104, 0.03125
      %v109 = vmul.f32 %v107, 0.03125
      %v110 = vadd.f32 %v108, 1e-05
      %v111 = vadd.f32 %v109, 1e-05
      %v112 = vrsqrt.pop %v110
      %v113 = vrsqrt.pop %v111
      %v114 = vmul.f32 %v98, %v112
      %v115 = vmul.f32 %v99, %v113
      %v116 = vld [vmem:[#allocation6] sm:$0x1]
      %v118 = vlaneseq
      %v119 = vshrl.u32 %v118, 7
      %v120 = vsub.s32 0, %v119
      %v121 = vrot.slane %v116, %v120
      %v123 = vmul.f32 %v114, %v121
      %v124 = vmul.f32 %v115, %v121
      %v125 = vld [vmem:[#allocation8] sm:$0x1]
      %v127 = vlaneseq
      %v128 = vshrl.u32 %v127, 7
      %v129 = vsub.s32 0, %v128
      %v130 = vrot.slane %v125, %v129
      %v132 = vadd.f32 %v123, %v130
      %v133 = vadd.f32 %v124, %v130
      %134 = vst.msk [vmem:[#allocation2] sm:$0xff] %vm89, %v132
      %135 = vst.msk [vmem:[#allocation2 + $0x8] sm:$0xff] %vm89, %v133
    $region45: #{tpu_custom_call.1} parent=1 // pred_fallthru
      _
    %v136 = vld [vmem:[#allocation2] sm:$0xff]
    %v137 = vld [vmem:[#allocation2 + $0x8] sm:$0xff]
    %v138 = vld [vmem:[#allocation9] sm:$0xff]
    %v139 = vld [vmem:[#allocation9 + $0x8] sm:$0xff]
    %v140 = vld [vmem:[#allocation9 + $0x10] sm:$0xff]
    %v141 = vld [vmem:[#allocation9 + $0x18] sm:$0xff]
    %v142 = vld [vmem:[#allocation11] sm:$0x1]
    %v144 = vlaneseq
    %v145 = vshrl.u32 %v144, 7
    %v146 = vsub.s32 0, %v145
    %v147 = vrot.slane %v142, %v146
    %vm149 = vcmask 261120
    %v151 = vsel %vm149, %v136, 0
    %v154 = vsel %vm149, %v137, 0
    %156 = vmatprep.subr.mxu0 0.0
    %157 = vmatpush1.msra.mxu0 %v138
    %158 = vmatprep.subr.mxu0 0.0
    %159 = vmatpush1.msra.mxu0 %v139
    %160 = vmatprep.subr.mxu0 0.0
    %161 = vmatpush1.msra.mxu0 %v140
    %162 = vmatprep.subr.mxu0 0.0
    %163 = vmatpush1.msra.mxu0 %v141
    %164 = vmatprep.subr.mxu0 0.0
    %165 = vmatpush1.msra.mxu0 0.0
    %166 = vmatprep.subr.mxu0 0.0
    %167 = vmatpush1.msra.mxu0 0.0
    %168 = vmatprep.subr.mxu0 0.0
    %169 = vmatpush1.msra.mxu0 0.0
    %170 = vmatprep.subr.mxu0 0.0
    %171 = vmatpush1.msra.mxu0 0.0
    %172 = vmatprep.subr.mxu0 0.0
    %173 = vmatpush1.msra.mxu0 0.0
    %174 = vmatprep.subr.mxu0 0.0
    %175 = vmatpush1.msra.mxu0 0.0
    %176 = vmatprep.subr.mxu0 0.0
    %177 = vmatpush1.msra.mxu0 0.0
    %178 = vmatprep.subr.mxu0 0.0
    %179 = vmatpush1.msra.mxu0 0.0
    %180 = vmatprep.subr.mxu0 0.0
    %181 = vmatpush1.msra.mxu0 0.0
    %182 = vmatprep.subr.mxu0 0.0
    %183 = vmatpush1.msra.mxu0 0.0
    %184 = vmatprep.subr.mxu0 0.0
    %185 = vmatpush1.msra.mxu0 0.0
    %186 = vmatprep.subr.mxu0 0.0
    %187 = vmatpush1.msra.mxu0 0.0
    %188 = vmatprep.subr.mxu0 0.0
    %189 = vmatpush1.msra.mxu0 0.0
    %190 = vmatprep.subr.mxu0 0.0
    %191 = vmatpush1.msra.mxu0 0.0
    %192 = vmatprep.subr.mxu0 0.0
    %193 = vmatpush1.msra.mxu0 0.0
    %194 = vmatprep.subr.mxu0 0.0
    %195 = vmatpush1.msra.mxu0 0.0
    %196 = vmatprep.subr.mxu0 0.0
    %197 = vmatpush1.msra.mxu0 0.0
    %198 = vmatprep.subr.mxu0 0.0
    %199 = vmatpush1.msra.mxu0 0.0
    %200 = vmatprep.subr.mxu0 0.0
    %201 = vmatpush1.msra.mxu0 0.0
    %202 = vmatprep.subr.mxu0 0.0
    %203 = vmatpush1.msra.mxu0 0.0
    %204 = vmatprep.subr.mxu0 0.0
    %205 = vmatpush1.msra.mxu0 0.0
    %206 = vmatprep.subr.mxu0 0.0
    %207 = vmatpush1.msra.mxu0 0.0
    %208 = vmatprep.subr.mxu0 0.0
    %209 = vmatpush1.msra.mxu0 0.0
    %210 = vmatprep.subr.mxu0 0.0
    %211 = vmatpush1.msra.mxu0 0.0
    %212 = vmatprep.subr.mxu0 0.0
    %213 = vmatpush1.msra.mxu0 0.0
    %214 = vmatprep.subr.mxu0 0.0
    %215 = vmatpush1.msra.mxu0 0.0
    %216 = vmatprep.subr.mxu0 0.0
    %217 = vmatpush1.msra.mxu0 0.0
    %218 = vmatprep.subr.mxu0 0.0
    %219 = vmatpush1.msra.mxu0 0.0
    %220 = vmatprep.mubr.f32.mxu0 0.0
    %221 = vmatmul.mubr.f32.gmra.mrb[0].mxu0 %v151
    %v222 = vpop.f32.mrb[0].mxu0
    %v223 = vadd.f32 %v147, %v222
    %v224 = vpop.f32.mrb[0].mxu0
    %225 = vmatprep.mubr.f32.mxu0 0.0
    %226 = vmatmul.mubr.f32.gmra.mrb[0].mxu0 %v154
    %v227 = vpop.f32.mrb[0].mxu0
    %v228 = vadd.f32 %v147, %v227
    %v229 = vpop.f32.mrb[0].mxu0
    %230 = vdwg.mxu0
    %231 = vst.msk [vmem:[#allocation12] sm:$0xff] %vm149, %v223
    %232 = vst.msk [vmem:[#allocation12 + $0x8] sm:$0xff] %vm149, %v228
    // Predicated region
    $region46: #{tpu_custom_call.1} parent=1 // pred_check
      _
    $region47: #{tpu_custom_call.1} parent=1 // pred_check_branch
      %234 = sbr.rel (0) target = $region49
    $region48: #{tpu_custom_call.1} parent=1 // pred_region
      %s236 = ssub.s32 256, 256
      %237 = vsyncadd [#allocation5], %s236
      %s238 = sshll.u32 [#allocation12], 4
      %s239 = int_to_ptr.vmem [resolvable:$true] %s238
      %244 = dma.vmem_to_hbm [thread:$0]  %s239, 256, %s5, [#allocation5], 128, 128, 8
    $region49: #{tpu_custom_call.1} parent=1 // pred_fallthru
      _
    // Predicated region
    $region50: #{tpu_custom_call.1} parent=1 // pred_check
      _
    $region51: #{tpu_custom_call.1} parent=1 // pred_check_branch
      %246 = sbr.rel (0) target = $region53
    $region52: #{tpu_custom_call.1} parent=1 // pred_region
      %247 = dma.done [#allocation5], 256
    $region53: #{tpu_custom_call.1} parent=1 // pred_fallthru
      _
    %248 = vsyncpa [#allocation4], 1
    %249 = vsyncpa [#allocation7], 1
    %250 = vsyncpa [#allocation10], 1
    %251 = vsyncpa [#allocation5], 1

// kernel: tpu_custom_call.1
$region0: #{tpu_custom_call.1}
  #allocation0 [shape = 'u32[]', space=smem, size = 0x4, offset = 0x4, fixed_abs, tag = 'smem constant byte address 0x4 - core index']
  #allocation1 [shape = 'u32[144,128]{1,0:T(1,128)}', space=vmem, size = 0x12000, scoped, tag = 'internal scratch']
  #allocation2 [shape = 'f32[16,32]{1,0:T(8,128)}', space=vmem, size = 0x2000, scoped, tag = 'scratch operand']
  %s0 = inlined_call_operand.hbm [shape: f32[16,32], index: 0, kind: input, shape index: {}]
  %s1 = inlined_call_operand.hbm [shape: f32[1,32], index: 1, kind: input, shape index: {}]
  %s2 = inlined_call_operand.hbm [shape: f32[1,32], index: 2, kind: input, shape index: {}]
  %s3 = inlined_call_operand.hbm [shape: f32[32,32], index: 3, kind: input, shape index: {}]
  %s4 = inlined_call_operand.hbm [shape: f32[1,32], index: 4, kind: input, shape index: {}]
  %s5 = inlined_call_operand.hbm [shape: f32[16,32], index: 5, kind: output, shape index: {}]
  %s6 = sld [smem:[#allocation0]]
  $region54: #{tpu_custom_call.1} parent=0
    _
  %s8 = ssub.s32 1, %s6
  %s9 = scalar_select 0, %s8, %s6
  $region1: #{tpu_custom_call.1} parent=0
    #allocation3 [shape = 'u8[8192]{0}', space=vmem, size = 0x2000, scoped, tag = 'input window, operand 0, single buffered']
    #allocation4 [shape = 's32[1]{0}', space=sflag, size = 0x4, scoped, tag = 'scoped memory for tpu_custom_call.1']
    #allocation5 [shape = 's32[1]{0}', space=sflag, size = 0x4, scoped, tag = 'scoped memory for tpu_custom_call.1']
    #allocation6 [shape = 'u8[512]{0}', space=vmem, size = 0x400, scoped, tag = 'input window, operand 1, single buffered']
    #allocation7 [shape = 's32[1]{0}', space=sflag, size = 0x4, scoped, tag = 'scoped memory for tpu_custom_call.1']
    #allocation8 [shape = 'u8[512]{0}', space=vmem, size = 0x400, scoped, tag = 'input window, operand 2, single buffered']
    #allocation9 [shape = 'u8[16384]{0}', space=vmem, size = 0x4000, scoped, tag = 'input window, operand 3, single buffered']
    #allocation10 [shape = 's32[1]{0}', space=sflag, size = 0x4, scoped, tag = 'scoped memory for tpu_custom_call.1']
    #allocation11 [shape = 'u8[512]{0}', space=vmem, size = 0x400, scoped, tag = 'input window, operand 4, single buffered']
    #allocation12 [shape = 'u8[8192]{0}', space=vmem, size = 0x2000, scoped, tag = 'output window, operand 0, single buffered']
    %10 = vsyncpa [#allocation4], 0
    %11 = vsyncpa [#allocation7], 0
    %12 = vsyncpa [#allocation10], 0
    %13 = vsyncpa [#allocation5], 0
    // Predicated region
    $region2: #{tpu_custom_call.1} parent=1 // pred_check
      _
    $region3: #{tpu_custom_call.1} parent=1 // pred_check_branch
      %15 = sbr.rel (0) target = $region5
    $region4: #{tpu_custom_call.1} parent=1 // pred_region
      %s17 = ssub.s32 256, 256
      %18 = vsyncadd [#allocation4], %s17
      %s19 = sshll.u32 [#allocation3], 4
      %s20 = int_to_ptr.vmem [resolvable:$true] %s19
      %25 = dma.hbm_to_vmem [thread:$0]  %s0, 256, %s20, [#allocation4], 128, 128, 8
    $region5: #{tpu_custom_call.1} parent=1 // pred_fallthru
      _
    // Predicated region
    $region6: #{tpu_custom_call.1} parent=1 // pred_check
      _
    $region7: #{tpu_custom_call.1} parent=1 // pred_check_branch
      %27 = sbr.rel (0) target = $region9
    $region8: #{tpu_custom_call.1} parent=1 // pred_region
      %s29 = ssub.s32 16, 16
      %30 = vsyncadd [#allocation7], %s29
      %s32 = sshll.u32 [#allocation6], 4
      %s33 = int_to_ptr.vmem [resolvable:$true] %s32
      %35 = dma.hbm_to_vmem [thread:$0]  %s1, 16, %s33, [#allocation7]
    $region9: #{tpu_custom_call.1} parent=1 // pred_fallthru
      _
    // Predicated region
    $region10: #{tpu_custom_call.1} parent=1 // pred_check
      _
    $region11: #{tpu_custom_call.1} parent=1 // pred_check_branch
      %37 = sbr.rel (0) target = $region13
    $region12: #{tpu_custom_call.1} parent=1 // pred_region
      %s39 = ssub.s32 16, 16
      %40 = vsyncadd [#allocation7], %s39
      %s42 = sshll.u32 [#allocation8], 4
      %s43 = int_to_ptr.vmem [resolvable:$true] %s42
      %45 = dma.hbm_to_vmem [thread:$0]  %s2, 16, %s43, [#allocation7]
    $region13: #{tpu_custom_call.1} parent=1 // pred_fallthru
      _
    // Predicated region
    $region14: #{tpu_custom_call.1} parent=1 // pred_check
      _
    $region15: #{tpu_custom_call.1} parent=1 // pred_check_branch
      %47 = sbr.rel (0) target = $region17
    $region16: #{tpu_custom_call.1} parent=1 // pred_region
      %s49 = ssub.s32 512, 512
      %50 = vsyncadd [#allocation10], %s49
      %s51 = sshll.u32 [#allocation9], 4
      %s52 = int_to_ptr.vmem [resolvable:$true] %s51
      %57 = dma.hbm_to_vmem [thread:$0]  %s3, 512, %s52, [#allocation10], 128, 128, 8
    $region17: #{tpu_custom_call.1} parent=1 // pred_fallthru
      _
    // Predicated region
    $region18: #{tpu_custom_call.1} parent=1 // pred_check
      _
    $region19: #{tpu_custom_call.1} parent=1 // pred_check_branch
      %59 = sbr.rel (0) target = $region21
    $region20: #{tpu_custom_call.1} parent=1 // pred_region
      %s61 = ssub.s32 16, 16
      %62 = vsyncadd [#allocation10], %s61
      %s64 = sshll.u32 [#allocation11], 4
      %s65 = int_to_ptr.vmem [resolvable:$true] %s64
      %67 = dma.hbm_to_vmem [thread:$0]  %s4, 16, %s65, [#allocation10]
    $region21: #{tpu_custom_call.1} parent=1 // pred_fallthru
      _
    // Predicated region
    $region22: #{tpu_custom_call.1} parent=1 // pred_check
      _
    $region23: #{tpu_custom_call.1} parent=1 // pred_check_branch
      %69 = sbr.rel (0) target = $region25
    $region24: #{tpu_custom_call.1} parent=1 // pred_region
      %70 = dma.done [#allocation4], 256
    $region25: #{tpu_custom_call.1} parent=1 // pred_fallthru
      _
    // Predicated region
    $region26: #{tpu_custom_call.1} parent=1 // pred_check
      _
    $region27: #{tpu_custom_call.1} parent=1 // pred_check_branch
      %72 = sbr.rel (0) target = $region29
    $region28: #{tpu_custom_call.1} parent=1 // pred_region
      %73 = dma.done [#allocation7], 16
    $region29: #{tpu_custom_call.1} parent=1 // pred_fallthru
      _
    // Predicated region
    $region30: #{tpu_custom_call.1} parent=1 // pred_check
      _
    $region31: #{tpu_custom_call.1} parent=1 // pred_check_branch
      %75 = sbr.rel (0) target = $region33
    $region32: #{tpu_custom_call.1} parent=1 // pred_region
      %76 = dma.done [#allocation7], 16
    $region33: #{tpu_custom_call.1} parent=1 // pred_fallthru
      _
    // Predicated region
    $region34: #{tpu_custom_call.1} parent=1 // pred_check
      _
    $region35: #{tpu_custom_call.1} parent=1 // pred_check_branch
      %78 = sbr.rel (0) target = $region37
    $region36: #{tpu_custom_call.1} parent=1 // pred_region
      %79 = dma.done [#allocation10], 512
    $region37: #{tpu_custom_call.1} parent=1 // pred_fallthru
      _
    // Predicated region
    $region38: #{tpu_custom_call.1} parent=1 // pred_check
      _
    $region39: #{tpu_custom_call.1} parent=1 // pred_check_branch
      %81 = sbr.rel (0) target = $region41
    $region40: #{tpu_custom_call.1} parent=1 // pred_region
      %82 = dma.done [#allocation10], 16
    $region41: #{tpu_custom_call.1} parent=1 // pred_fallthru
      _
    %p83 = scmp.eq.s32.totalorder 0, 0
    // Predicated region
    $region42: #{tpu_custom_call.1} parent=1 // pred_check
      %p84 = pneg %p83
    $region43: #{tpu_custom_call.1} parent=1 // pred_check_branch
      %86 = sbr.rel (%p84) target = $region45
    $region44: #{tpu_custom_call.1} parent=1 // pred_region
      %v87 = vld [vmem:[#allocation3] sm:$0xff]
      %v88 = vld [vmem:[#allocation3 + $0x8] sm:$0xff]
      %vm89 = vcmask 261120
      %v90 = vsel %vm89, %v87, 0.0
      %91 = vadd.xlane.f32.xlu0 %v90
      %v92 = vpop.xlane.xlu0 %91
      %v93 = vsel %vm89, %v88, 0.0
      %94 = vadd.xlane.f32.xlu0 %v93
      %v95 = vpop.xlane.xlu0 %94
      %v96 = vmul.f32 %v92, 0.03125
      %v97 = vmul.f32 %v95, 0.03125
      %v98 = vsub.f32 %v87, %v96
      %v99 = vsub.f32 %v88, %v97
      %v100 = vmul.f32 %v98, %v98
      %v101 = vmul.f32 %v99, %v99
      %v102 = vsel %vm89, %v100, 0.0
      %103 = vadd.xlane.f32.xlu0 %v102
      %v104 = vpop.xlane.xlu0 %103
      %v105 = vsel %vm89, %v101, 0.0
      %106 = vadd.xlane.f32.xlu0 %v105
      %v107 = vpop.xlane.xlu0 %106
      %v108 = vmul.f32 %v104, 0.03125
      %v109 = vmul.f32 %v107, 0.03125
      %v110 = vadd.f32 %v108, 1e-05
      %v111 = vadd.f32 %v109, 1e-05
      %v112 = vrsqrt.pop %v110
      %v113 = vrsqrt.pop %v111
      %v114 = vmul.f32 %v98, %v112
      %v115 = vmul.f32 %v99, %v113
      %v116 = vld [vmem:[#allocation6] sm:$0x1]
      %v118 = vlaneseq
      %v119 = vshrl.u32 %v118, 7
      %v120 = vsub.s32 0, %v119
      %v121 = vrot.slane %v116, %v120
      %v123 = vmul.f32 %v114, %v121
      %v124 = vmul.f32 %v115, %v121
      %v125 = vld [vmem:[#allocation8] sm:$0x1]
      %v127 = vlaneseq
      %v128 = vshrl.u32 %v127, 7
      %v129 = vsub.s32 0, %v128
      %v130 = vrot.slane %v125, %v129
      %v132 = vadd.f32 %v123, %v130
      %v133 = vadd.f32 %v124, %v130
      %134 = vst.msk [vmem:[#allocation2] sm:$0xff] %vm89, %v132
      %135 = vst.msk [vmem:[#allocation2 + $0x8] sm:$0xff] %vm89, %v133
    $region45: #{tpu_custom_call.1} parent=1 // pred_fallthru
      _
    %v136 = vld [vmem:[#allocation2] sm:$0xff]
    %v137 = vld [vmem:[#allocation2 + $0x8] sm:$0xff]
    %v138 = vld [vmem:[#allocation9] sm:$0xff]
    %v139 = vld [vmem:[#allocation9 + $0x8] sm:$0xff]
    %v140 = vld [vmem:[#allocation9 + $0x10] sm:$0xff]
    %v141 = vld [vmem:[#allocation9 + $0x18] sm:$0xff]
    %v142 = vld [vmem:[#allocation11] sm:$0x1]
    %v144 = vlaneseq
    %v145 = vshrl.u32 %v144, 7
    %v146 = vsub.s32 0, %v145
    %v147 = vrot.slane %v142, %v146
    %vm149 = vcmask 261120
    %v151 = vsel %vm149, %v136, 0
    %v154 = vsel %vm149, %v137, 0
    %156 = vmatprep.subr.mxu0 0.0
    %157 = vmatpush1.msra.mxu0 %v138
    %158 = vmatprep.subr.mxu0 0.0
    %159 = vmatpush1.msra.mxu0 %v139
    %160 = vmatprep.subr.mxu0 0.0
    %161 = vmatpush1.msra.mxu0 %v140
    %162 = vmatprep.subr.mxu0 0.0
    %163 = vmatpush1.msra.mxu0 %v141
    %164 = vmatprep.subr.mxu0 0.0
    %165 = vmatpush1.msra.mxu0 0.0
    %166 = vmatprep.subr.mxu0 0.0
    %167 = vmatpush1.msra.mxu0 0.0
    %168 = vmatprep.subr.mxu0 0.0
    %169 = vmatpush1.msra.mxu0 0.0
    %170 = vmatprep.subr.mxu0 0.0
    %171 = vmatpush1.msra.mxu0 0.0
    %172 = vmatprep.subr.mxu0 0.0
    %173 = vmatpush1.msra.mxu0 0.0
    %174 = vmatprep.subr.mxu0 0.0
    %175 = vmatpush1.msra.mxu0 0.0
    %176 = vmatprep.subr.mxu0 0.0
    %177 = vmatpush1.msra.mxu0 0.0
    %178 = vmatprep.subr.mxu0 0.0
    %179 = vmatpush1.msra.mxu0 0.0
    %180 = vmatprep.subr.mxu0 0.0
    %181 = vmatpush1.msra.mxu0 0.0
    %182 = vmatprep.subr.mxu0 0.0
    %183 = vmatpush1.msra.mxu0 0.0
    %184 = vmatprep.subr.mxu0 0.0
    %185 = vmatpush1.msra.mxu0 0.0
    %186 = vmatprep.subr.mxu0 0.0
    %187 = vmatpush1.msra.mxu0 0.0
    %188 = vmatprep.subr.mxu0 0.0
    %189 = vmatpush1.msra.mxu0 0.0
    %190 = vmatprep.subr.mxu0 0.0
    %191 = vmatpush1.msra.mxu0 0.0
    %192 = vmatprep.subr.mxu0 0.0
    %193 = vmatpush1.msra.mxu0 0.0
    %194 = vmatprep.subr.mxu0 0.0
    %195 = vmatpush1.msra.mxu0 0.0
    %196 = vmatprep.subr.mxu0 0.0
    %197 = vmatpush1.msra.mxu0 0.0
    %198 = vmatprep.subr.mxu0 0.0
    %199 = vmatpush1.msra.mxu0 0.0
    %200 = vmatprep.subr.mxu0 0.0
    %201 = vmatpush1.msra.mxu0 0.0
    %202 = vmatprep.subr.mxu0 0.0
    %203 = vmatpush1.msra.mxu0 0.0
    %204 = vmatprep.subr.mxu0 0.0
    %205 = vmatpush1.msra.mxu0 0.0
    %206 = vmatprep.subr.mxu0 0.0
    %207 = vmatpush1.msra.mxu0 0.0
    %208 = vmatprep.subr.mxu0 0.0
    %209 = vmatpush1.msra.mxu0 0.0
    %210 = vmatprep.subr.mxu0 0.0
    %211 = vmatpush1.msra.mxu0 0.0
    %212 = vmatprep.subr.mxu0 0.0
    %213 = vmatpush1.msra.mxu0 0.0
    %214 = vmatprep.subr.mxu0 0.0
    %215 = vmatpush1.msra.mxu0 0.0
    %216 = vmatprep.subr.mxu0 0.0
    %217 = vmatpush1.msra.mxu0 0.0
    %218 = vmatprep.subr.mxu0 0.0
    %219 = vmatpush1.msra.mxu0 0.0
    %220 = vmatprep.mubr.f32.mxu0 0.0
    %221 = vmatmul.mubr.f32.gmra.mrb[0].mxu0 %v151
    %v222 = vpop.f32.mrb[0].mxu0
    %v223 = vadd.f32 %v147, %v222
    %v224 = vpop.f32.mrb[0].mxu0
    %225 = vmatprep.mubr.f32.mxu0 0.0
    %226 = vmatmul.mubr.f32.gmra.mrb[0].mxu0 %v154
    %v227 = vpop.f32.mrb[0].mxu0
    %v228 = vadd.f32 %v147, %v227
    %v229 = vpop.f32.mrb[0].mxu0
    %230 = vdwg.mxu0
    %231 = vst.msk [vmem:[#allocation12] sm:$0xff] %vm149, %v223
    %232 = vst.msk [vmem:[#allocation12 + $0x8] sm:$0xff] %vm149, %v228
    // Predicated region
    $region46: #{tpu_custom_call.1} parent=1 // pred_check
      _
    $region47: #{tpu_custom_call.1} parent=1 // pred_check_branch
      %234 = sbr.rel (0) target = $region49
    $region48: #{tpu_custom_call.1} parent=1 // pred_region
      %s236 = ssub.s32 256, 256
      %237 = vsyncadd [#allocation5], %s236
      %s238 = sshll.u32 [#allocation12], 4
      %s239 = int_to_ptr.vmem [resolvable:$true] %s238
      %244 = dma.vmem_to_hbm [thread:$0]  %s239, 256, %s5, [#allocation5], 128, 128, 8
    $region49: #{tpu_custom_call.1} parent=1 // pred_fallthru
      _
    // Predicated region
    $region50: #{tpu_custom_call.1} parent=1 // pred_check
      _
    $region51: #{tpu_custom_call.1} parent=1 // pred_check_branch
      %246 = sbr.rel (0) target = $region53
    $region52: #{tpu_custom_call.1} parent=1 // pred_region
      %247 = dma.done [#allocation5], 256
    $region53: #{tpu_custom_call.1} parent=1 // pred_fallthru
      _
    %248 = vsyncpa [#allocation4], 1
    %249 = vsyncpa [#allocation7], 1
    %250 = vsyncpa [#allocation10], 1
    %251 = vsyncpa [#allocation5], 1

</llo_original>
